<compile_context>
chip_gen: v7x
topology: tpu7x:2x2x1
jax: 0.10.0
libtpu: 0.0.40
codegen_flags: <defaults>
</compile_context>

<pallas_src>
import functools

import jax
import jax.numpy as jnp
from jax.experimental import pallas as pl
from jax.experimental.pallas import tpu as pltpu


def _mlp_kernel(x_ref, w1_ref, b1_ref, w2_ref, b2_ref, o_ref, acc_ref):
    j = pl.program_id(1)

    @pl.when(j == 0)
    def _():
        acc_ref[...] = jnp.zeros_like(acc_ref)

    # First linear (chunk of the intermediate dim):
    #   [tm, H] @ [H, ti] -> [tm, ti], accumulate in f32 on the MXU.
    h = jnp.dot(x_ref[...], w1_ref[...], preferred_element_type=jnp.float32)
    h = h + b1_ref[...]                       # bias broadcast over rows
    # Activation: "relu2" (squared ReLU), Persimmon's default hidden_act,
    # kept in f32 on the VPU (works on v5e which has no bf16 VPU path).
    h = jnp.square(jnp.maximum(h, 0.0))

    # Second linear partial product: [tm, ti] @ [ti, H] -> [tm, H], accumulate.
    acc_ref[...] += jnp.dot(h.astype(w2_ref.dtype), w2_ref[...],
                            preferred_element_type=jnp.float32)

    @pl.when(j == pl.num_programs(1) - 1)
    def _():
        # Add b2 exactly once, at the end of the reduction over I.
        o_ref[...] = (acc_ref[...] + b2_ref[...]).astype(o_ref.dtype)


@functools.partial(jax.jit, static_argnames=("tile_m", "tile_i"))
def _persimmon_mlp_call(x, w1_t, b1, w2_t, b2, *, tile_m, tile_i):
    T, H = x.shape
    I = w1_t.shape[1]
    grid = (T // tile_m, I // tile_i)

    return pl.pallas_call(
        _mlp_kernel,
        out_shape=jax.ShapeDtypeStruct((T, H), x.dtype),
        grid_spec=pltpu.PrefetchScalarGridSpec(
            num_scalar_prefetch=0,
            grid=grid,
            in_specs=[
                pl.BlockSpec((tile_m, H), lambda i, j: (i, 0)),   # x tile
                pl.BlockSpec((H, tile_i), lambda i, j: (0, j)),   # W1^T chunk
                pl.BlockSpec((1, tile_i), lambda i, j: (0, j)),   # b1 chunk
                pl.BlockSpec((tile_i, H), lambda i, j: (j, 0)),   # W2^T chunk
                pl.BlockSpec((1, H), lambda i, j: (0, 0)),        # b2 (tiny)
            ],
            out_specs=pl.BlockSpec((tile_m, H), lambda i, j: (i, 0)),
            scratch_shapes=[pltpu.VMEM((tile_m, H), jnp.float32)],
        ),
        compiler_params=pltpu.CompilerParams(
            dimension_semantics=("parallel", "arbitrary"),
            vmem_limit_bytes=64 * 1024 * 1024,
        ),
    )(x, w1_t, b1, w2_t, b2)


def _round_up(n, m):
    return ((n + m - 1) // m) * m


def persimmon_mlp(x, w1_t, b1, w2_t, b2, *, tile_m=256, tile_i=1024):
    """Fused PersimmonMLP.

    x:    [T, H]     flattened tokens
    w1_t: [H, I]     dense_h_to_4h weight, pre-transposed
    b1:   [I]        dense_h_to_4h bias
    w2_t: [I, H]     dense_4h_to_h weight, pre-transposed
    b2:   [H]        dense_4h_to_h bias
    """
    T, H = x.shape
    I = w1_t.shape[1]

    # Clamp tiles to the actual problem size (keeps small configs working).
    tile_m = min(tile_m, _round_up(T, 8))
    tile_i = min(tile_i, I)
    assert I % tile_i == 0, "intermediate_size must be divisible by tile_i"

    # Pad the token axis so it divides tile_m; padded rows are sliced off.
    T_pad = _round_up(T, tile_m)
    if T_pad != T:
        x = jnp.pad(x, ((0, T_pad - T), (0, 0)))

    out = _persimmon_mlp_call(
        x, w1_t, b1.reshape(1, I), w2_t, b2.reshape(1, H),
        tile_m=tile_m, tile_i=tile_i)
    return out[:T]


def _ref_mlp(x, w1_t, b1, w2_t, b2):
    h = x.astype(jnp.float32) @ w1_t.astype(jnp.float32) + b1.astype(jnp.float32)
    h = jnp.square(jnp.maximum(h, 0.0))
    y = h @ w2_t.astype(jnp.float32) + b2.astype(jnp.float32)
    return y.astype(x.dtype)


if __name__ == "__main__":
    # Small config consistent with the module: hidden_size=32, intermediate=128.
    batch, seq, hidden, intermediate = 2, 8, 32, 128
    key = jax.random.PRNGKey(0)
    k_x, k_w1, k_b1, k_w2, k_b2 = jax.random.split(key, 5)

    x = jax.random.normal(k_x, (batch, seq, hidden), dtype=jnp.float32)

    # nn.Linear parameter shapes: weight [out, in], bias [out].
    w1 = jax.random.normal(k_w1, (intermediate, hidden), dtype=jnp.float32) * 0.05
    b1 = jax.random.normal(k_b1, (intermediate,), dtype=jnp.float32) * 0.05
    w2 = jax.random.normal(k_w2, (hidden, intermediate), dtype=jnp.float32) * 0.05
    b2 = jax.random.normal(k_b2, (hidden,), dtype=jnp.float32) * 0.05

    # Glue: flatten tokens, pre-transpose weights to [in, out].
    x2d = x.reshape(batch * seq, hidden)
    w1_t = w1.T                      # [H, I]
    w2_t = w2.T                      # [I, H]

    out2d = persimmon_mlp(x2d, w1_t, b1, w2_t, b2)
    out = out2d.reshape(batch, seq, hidden)
    jax.block_until_ready(out)

    # Correctness check vs. pure-JAX reference.
    ref = _ref_mlp(x2d, w1_t, b1, w2_t, b2).reshape(batch, seq, hidden)
    assert jnp.allclose(out, ref, atol=1e-5, rtol=1e-5), "mismatch vs reference"

    print("KERNEL_OK")
</pallas_src>

<mosaic_0001>
module attributes {stable_mosaic.version = 11 : i64} {
  func.func @_mlp_kernel(%arg0: i32, %arg1: i32, %arg2: memref<16x32xf32, #tpu.memory_space<vmem>>, %arg3: memref<32x128xf32, #tpu.memory_space<vmem>>, %arg4: memref<1x128xf32, #tpu.memory_space<vmem>>, %arg5: memref<128x32xf32, #tpu.memory_space<vmem>>, %arg6: memref<1x32xf32, #tpu.memory_space<vmem>>, %arg7: memref<16x32xf32, #tpu.memory_space<vmem>>, %arg8: memref<16x32xf32, #tpu.memory_space<vmem>>) attributes {dimension_semantics = [#tpu.dimension_semantics<parallel>, #tpu.dimension_semantics<arbitrary>], iteration_bounds = array<i64: 1, 1>, scalar_prefetch = 0 : i64, scratch_operands = 1 : i64, tpu.core_type = #tpu.core_type<tc>, window_params = [{transform_indices = @transform_0, window_bounds = array<i64: 16, 32>}, {transform_indices = @transform_1, window_bounds = array<i64: 32, 128>}, {transform_indices = @transform_2, window_bounds = array<i64: 1, 128>}, {transform_indices = @transform_3, window_bounds = array<i64: 128, 32>}, {pipeline_mode = #tpu.pipeline_mode<synchronous>, transform_indices = @transform_4, window_bounds = array<i64: 1, 32>}, {transform_indices = @transform_5, window_bounds = array<i64: 16, 32>}]} {
    %c0_i32 = arith.constant 0 : i32
    %0 = arith.cmpi eq, %arg1, %c0_i32 : i32
    %1 = arith.extui %0 : i1 to i32
    %c0_i32_0 = arith.constant 0 : i32
    %2 = arith.cmpi ne, %1, %c0_i32_0 : i32
    scf.if %2 {
      %cst_16 = arith.constant 0.000000e+00 : f32
      %20 = vector.broadcast %cst_16 : f32 to vector<16x32xf32>
      %c0_17 = arith.constant 0 : index
      %c0_18 = arith.constant 0 : index
      %21 = vector.load %arg8[%c0_17, %c0_18] : memref<16x32xf32, #tpu.memory_space<vmem>>, vector<16x32xf32>
      tpu.vector_store %arg8[%c0_17, %c0_18], %20 {strides = array<i32>} : memref<16x32xf32, #tpu.memory_space<vmem>>, vector<16x32xf32>,
    } else {
    }
    %c0 = arith.constant 0 : index
    %c0_1 = arith.constant 0 : index
    %3 = vector.load %arg2[%c0, %c0_1] : memref<16x32xf32, #tpu.memory_space<vmem>>, vector<16x32xf32>
    %c0_2 = arith.constant 0 : index
    %c0_3 = arith.constant 0 : index
    %4 = vector.load %arg3[%c0_2, %c0_3] : memref<32x128xf32, #tpu.memory_space<vmem>>, vector<32x128xf32>
    %cst = arith.constant dense<0.000000e+00> : vector<16x128xf32>
    %5 = tpu.matmul %3, %4, %cst {dimension_numbers = #tpu.dot_dimension_numbers<[1], [0], [0], [1], [0, 0, 1, 1], [], []>} : vector<16x32xf32>, vector<32x128xf32>, vector<16x128xf32> -> vector<16x128xf32>
    %c0_4 = arith.constant 0 : index
    %c0_5 = arith.constant 0 : index
    %6 = vector.load %arg4[%c0_4, %c0_5] : memref<1x128xf32, #tpu.memory_space<vmem>>, vector<1x128xf32>
    %7 = vector.broadcast %6 : vector<1x128xf32> to vector<16x128xf32>
    %8 = arith.addf %5, %7 : vector<16x128xf32>
    %cst_6 = arith.constant 0.000000e+00 : f32
    %9 = vector.broadcast %cst_6 : f32 to vector<16x128xf32>
    %10 = arith.maximumf %8, %9 : vector<16x128xf32>
    %11 = arith.mulf %10, %10 : vector<16x128xf32>
    %c0_7 = arith.constant 0 : index
    %c0_8 = arith.constant 0 : index
    %12 = vector.load %arg8[%c0_7, %c0_8] : memref<16x32xf32, #tpu.memory_space<vmem>>, vector<16x32xf32>
    %c0_9 = arith.constant 0 : index
    %c0_10 = arith.constant 0 : index
    %13 = vector.load %arg5[%c0_9, %c0_10] : memref<128x32xf32, #tpu.memory_space<vmem>>, vector<128x32xf32>
    %cst_11 = arith.constant dense<0.000000e+00> : vector<16x32xf32>
    %14 = tpu.matmul %11, %13, %cst_11 {dimension_numbers = #tpu.dot_dimension_numbers<[1], [0], [0], [1], [0, 0, 1, 1], [], []>} : vector<16x128xf32>, vector<128x32xf32>, vector<16x32xf32> -> vector<16x32xf32>
    %15 = arith.addf %12, %14 : vector<16x32xf32>
    %c0_12 = arith.constant 0 : index
    %c0_13 = arith.constant 0 : index
    %16 = vector.load %arg8[%c0_12, %c0_13] : memref<16x32xf32, #tpu.memory_space<vmem>>, vector<16x32xf32>
    tpu.vector_store %arg8[%c0_12, %c0_13], %15 {strides = array<i32>} : memref<16x32xf32, #tpu.memory_space<vmem>>, vector<16x32xf32>,
    %c0_i32_14 = arith.constant 0 : i32
    %17 = arith.cmpi eq, %arg1, %c0_i32_14 : i32
    %18 = arith.extui %17 : i1 to i32
    %c0_i32_15 = arith.constant 0 : i32
    %19 = arith.cmpi ne, %18, %c0_i32_15 : i32
    scf.if %19 {
      %c0_16 = arith.constant 0 : index
      %c0_17 = arith.constant 0 : index
      %20 = vector.load %arg8[%c0_16, %c0_17] : memref<16x32xf32, #tpu.memory_space<vmem>>, vector<16x32xf32>
      %c0_18 = arith.constant 0 : index
      %c0_19 = arith.constant 0 : index
      %21 = vector.load %arg6[%c0_18, %c0_19] : memref<1x32xf32, #tpu.memory_space<vmem>>, vector<1x32xf32>
      %22 = vector.broadcast %21 : vector<1x32xf32> to vector<16x32xf32>
      %23 = arith.addf %20, %22 : vector<16x32xf32>
      %c0_20 = arith.constant 0 : index
      %c0_21 = arith.constant 0 : index
      %24 = vector.load %arg7[%c0_20, %c0_21] : memref<16x32xf32, #tpu.memory_space<vmem>>, vector<16x32xf32>
      tpu.vector_store %arg7[%c0_20, %c0_21], %23 {strides = array<i32>} : memref<16x32xf32, #tpu.memory_space<vmem>>, vector<16x32xf32>,
    } else {
    }
    return
  }
  func.func @transform_0(%arg0: i32, %arg1: i32) -> (i32, i32) {
    %c0_i32 = arith.constant 0 : i32
    %c0_i32_0 = arith.constant 0 : i32
    return %arg0, %c0_i32 : i32, i32
  }
  func.func @transform_1(%arg0: i32, %arg1: i32) -> (i32, i32) {
    %c0_i32 = arith.constant 0 : i32
    %c0_i32_0 = arith.constant 0 : i32
    return %c0_i32, %arg1 : i32, i32
  }
  func.func @transform_2(%arg0: i32, %arg1: i32) -> (i32, i32) {
    %c0_i32 = arith.constant 0 : i32
    %c0_i32_0 = arith.constant 0 : i32
    return %c0_i32, %arg1 : i32, i32
  }
  func.func @transform_3(%arg0: i32, %arg1: i32) -> (i32, i32) {
    %c0_i32 = arith.constant 0 : i32
    %c0_i32_0 = arith.constant 0 : i32
    return %arg1, %c0_i32 : i32, i32
  }
  func.func @transform_4(%arg0: i32, %arg1: i32) -> (i32, i32) {
    %c0_i32 = arith.constant 0 : i32
    %c0_i32_0 = arith.constant 0 : i32
    %c0_i32_1 = arith.constant 0 : i32
    return %c0_i32, %c0_i32_0 : i32, i32
  }
  func.func @transform_5(%arg0: i32, %arg1: i32) -> (i32, i32) {
    %c0_i32 = arith.constant 0 : i32
    %c0_i32_0 = arith.constant 0 : i32
    return %arg0, %c0_i32 : i32, i32
  }
}

</mosaic_0001>

<llo_original>
// kernel: _persimmon_mlp_call.1
$region0: #{_persimmon_mlp_call.1}
  #allocation0 [shape = 'u32[]', space=smem, size = 0x4, offset = 0x4, fixed_abs, tag = 'smem constant byte address 0x4 - core index']
  #allocation1 [shape = 'u32[144,128]{1,0:T(1,128)}', space=vmem, size = 0x12000, scoped, tag = 'internal scratch']
  #allocation2 [shape = 'f32[16,32]{1,0:T(8,128)}', space=vmem, size = 0x2000, scoped, tag = 'scratch operand']
  %s0 = inlined_call_operand.hbm [shape: f32[16,32], index: 0, kind: input, shape index: {}]
  %s1 = inlined_call_operand.hbm [shape: f32[32,128], index: 1, kind: input, shape index: {}]
  %s2 = inlined_call_operand.hbm [shape: f32[1,128], index: 2, kind: input, shape index: {}]
  %s3 = inlined_call_operand.hbm [shape: f32[128,32], index: 3, kind: input, shape index: {}]
  %s4 = inlined_call_operand.hbm [shape: f32[1,32], index: 4, kind: input, shape index: {}]
  %s5 = inlined_call_operand.hbm [shape: f32[16,32], index: 5, kind: output, shape index: {}]
  %s6 = sld [smem:[#allocation0]]
  $region58: #{_persimmon_mlp_call.1} parent=0
    _
  %s8 = ssub.s32 1, %s6
  %s9 = scalar_select 0, %s8, %s6
  $region1: #{_persimmon_mlp_call.1} parent=0
    #allocation3 [shape = 'u8[8192]{0}', space=vmem, size = 0x2000, scoped, tag = 'input window, operand 0, single buffered']
    #allocation4 [shape = 's32[1]{0}', space=sflag, size = 0x4, scoped, tag = 'scoped memory for _persimmon_mlp_call.1']
    #allocation5 [shape = 's32[1]{0}', space=sflag, size = 0x4, scoped, tag = 'scoped memory for _persimmon_mlp_call.1']
    #allocation6 [shape = 'u8[16384]{0}', space=vmem, size = 0x4000, scoped, tag = 'input window, operand 1, single buffered']
    #allocation7 [shape = 's32[1]{0}', space=sflag, size = 0x4, scoped, tag = 'scoped memory for _persimmon_mlp_call.1']
    #allocation8 [shape = 'u8[512]{0}', space=vmem, size = 0x400, scoped, tag = 'input window, operand 2, single buffered']
    #allocation9 [shape = 'u8[65536]{0}', space=vmem, size = 0x10000, scoped, tag = 'input window, operand 3, single buffered']
    #allocation10 [shape = 's32[1]{0}', space=sflag, size = 0x4, scoped, tag = 'scoped memory for _persimmon_mlp_call.1']
    #allocation11 [shape = 'u8[512]{0}', space=vmem, size = 0x400, scoped, tag = 'input window, operand 4, single buffered']
    #allocation12 [shape = 'u8[8192]{0}', space=vmem, size = 0x2000, scoped, tag = 'output window, operand 0, single buffered']
    %10 = vsyncpa [#allocation4], 0
    %11 = vsyncpa [#allocation7], 0
    %12 = vsyncpa [#allocation10], 0
    %13 = vsyncpa [#allocation5], 0
    // Predicated region
    $region2: #{_persimmon_mlp_call.1} parent=1 // pred_check
      _
    $region3: #{_persimmon_mlp_call.1} parent=1 // pred_check_branch
      %15 = sbr.rel (0) target = $region5
    $region4: #{_persimmon_mlp_call.1} parent=1 // pred_region
      %s17 = ssub.s32 256, 256
      %18 = vsyncadd [#allocation4], %s17
      %s19 = sshll.u32 [#allocation3], 4
      %s20 = int_to_ptr.vmem [resolvable:$true] %s19
      %25 = dma.hbm_to_vmem [thread:$0]  %s0, 256, %s20, [#allocation4], 128, 128, 8
    $region5: #{_persimmon_mlp_call.1} parent=1 // pred_fallthru
      _
    // Predicated region
    $region6: #{_persimmon_mlp_call.1} parent=1 // pred_check
      _
    $region7: #{_persimmon_mlp_call.1} parent=1 // pred_check_branch
      %27 = sbr.rel (0) target = $region9
    $region8: #{_persimmon_mlp_call.1} parent=1 // pred_region
      %s29 = ssub.s32 512, 512
      %30 = vsyncadd [#allocation7], %s29
      %s31 = sshll.u32 [#allocation6], 4
      %s32 = int_to_ptr.vmem [resolvable:$true] %s31
      %37 = dma.hbm_to_vmem [thread:$0]  %s1, 512, %s32, [#allocation7], 128, 128, 8
    $region9: #{_persimmon_mlp_call.1} parent=1 // pred_fallthru
      _
    // Predicated region
    $region10: #{_persimmon_mlp_call.1} parent=1 // pred_check
      _
    $region11: #{_persimmon_mlp_call.1} parent=1 // pred_check_branch
      %39 = sbr.rel (0) target = $region13
    $region12: #{_persimmon_mlp_call.1} parent=1 // pred_region
      %s41 = ssub.s32 16, 16
      %42 = vsyncadd [#allocation7], %s41
      %s44 = sshll.u32 [#allocation8], 4
      %s45 = int_to_ptr.vmem [resolvable:$true] %s44
      %47 = dma.hbm_to_vmem [thread:$0]  %s2, 16, %s45, [#allocation7]
    $region13: #{_persimmon_mlp_call.1} parent=1 // pred_fallthru
      _
    // Predicated region
    $region14: #{_persimmon_mlp_call.1} parent=1 // pred_check
      _
    $region15: #{_persimmon_mlp_call.1} parent=1 // pred_check_branch
      %49 = sbr.rel (0) target = $region17
    $region16: #{_persimmon_mlp_call.1} parent=1 // pred_region
      %s51 = ssub.s32 2048, 2048
      %52 = vsyncadd [#allocation10], %s51
      %s53 = sshll.u32 [#allocation9], 4
      %s54 = int_to_ptr.vmem [resolvable:$true] %s53
      %59 = dma.hbm_to_vmem [thread:$0]  %s3, 2048, %s54, [#allocation10], 128, 128, 8
    $region17: #{_persimmon_mlp_call.1} parent=1 // pred_fallthru
      _
    // Predicated region
    $region18: #{_persimmon_mlp_call.1} parent=1 // pred_check
      _
    $region19: #{_persimmon_mlp_call.1} parent=1 // pred_check_branch
      %61 = sbr.rel (0) target = $region21
    $region20: #{_persimmon_mlp_call.1} parent=1 // pred_region
      %s63 = ssub.s32 16, 16
      %64 = vsyncadd [#allocation10], %s63
      %s66 = sshll.u32 [#allocation11], 4
      %s67 = int_to_ptr.vmem [resolvable:$true] %s66
      %69 = dma.hbm_to_vmem [thread:$0]  %s4, 16, %s67, [#allocation10]
    $region21: #{_persimmon_mlp_call.1} parent=1 // pred_fallthru
      _
    // Predicated region
    $region22: #{_persimmon_mlp_call.1} parent=1 // pred_check
      _
    $region23: #{_persimmon_mlp_call.1} parent=1 // pred_check_branch
      %71 = sbr.rel (0) target = $region25
    $region24: #{_persimmon_mlp_call.1} parent=1 // pred_region
      %72 = dma.done [#allocation4], 256
    $region25: #{_persimmon_mlp_call.1} parent=1 // pred_fallthru
      _
    // Predicated region
    $region26: #{_persimmon_mlp_call.1} parent=1 // pred_check
      _
    $region27: #{_persimmon_mlp_call.1} parent=1 // pred_check_branch
      %74 = sbr.rel (0) target = $region29
    $region28: #{_persimmon_mlp_call.1} parent=1 // pred_region
      %75 = dma.done [#allocation7], 512
    $region29: #{_persimmon_mlp_call.1} parent=1 // pred_fallthru
      _
    // Predicated region
    $region30: #{_persimmon_mlp_call.1} parent=1 // pred_check
      _
    $region31: #{_persimmon_mlp_call.1} parent=1 // pred_check_branch
      %77 = sbr.rel (0) target = $region33
    $region32: #{_persimmon_mlp_call.1} parent=1 // pred_region
      %78 = dma.done [#allocation7], 16
    $region33: #{_persimmon_mlp_call.1} parent=1 // pred_fallthru
      _
    // Predicated region
    $region34: #{_persimmon_mlp_call.1} parent=1 // pred_check
      _
    $region35: #{_persimmon_mlp_call.1} parent=1 // pred_check_branch
      %80 = sbr.rel (0) target = $region37
    $region36: #{_persimmon_mlp_call.1} parent=1 // pred_region
      %81 = dma.done [#allocation10], 2048
    $region37: #{_persimmon_mlp_call.1} parent=1 // pred_fallthru
      _
    // Predicated region
    $region38: #{_persimmon_mlp_call.1} parent=1 // pred_check
      _
    $region39: #{_persimmon_mlp_call.1} parent=1 // pred_check_branch
      %83 = sbr.rel (0) target = $region41
    $region40: #{_persimmon_mlp_call.1} parent=1 // pred_region
      %84 = dma.done [#allocation10], 16
    $region41: #{_persimmon_mlp_call.1} parent=1 // pred_fallthru
      _
    %p85 = scmp.eq.s32.totalorder 0, 0
    // Predicated region
    $region42: #{_persimmon_mlp_call.1} parent=1 // pred_check
      %p86 = pneg %p85
    $region43: #{_persimmon_mlp_call.1} parent=1 // pred_check_branch
      %88 = sbr.rel (%p86) target = $region45
    $region44: #{_persimmon_mlp_call.1} parent=1 // pred_region
      %vm89 = vcmask 261120
      %90 = vst.msk [vmem:[#allocation2] sm:$0xff] %vm89, 0.0
      %91 = vst.msk [vmem:[#allocation2 + $0x8] sm:$0xff] %vm89, 0.0
    $region45: #{_persimmon_mlp_call.1} parent=1 // pred_fallthru
      _
    %v92 = vld [vmem:[#allocation3] sm:$0xff]
    %v93 = vld [vmem:[#allocation3 + $0x8] sm:$0xff]
    %v94 = vld [vmem:[#allocation6] sm:$0xff]
    %v95 = vld [vmem:[#allocation6 + $0x8] sm:$0xff]
    %v96 = vld [vmem:[#allocation6 + $0x10] sm:$0xff]
    %v97 = vld [vmem:[#allocation6 + $0x18] sm:$0xff]
    %v98 = vld [vmem:[#allocation8] sm:$0x1]
    %v100 = vlaneseq
    %v101 = vshrl.u32 %v100, 7
    %v102 = vsub.s32 0, %v101
    %v103 = vrot.slane %v98, %v102
    %vm105 = vcmask 261120
    %v107 = vsel %vm105, %v92, 0
    %v110 = vsel %vm105, %v93, 0
    %112 = vmatprep.subr.mxu0 0.0
    %113 = vmatpush1.msra.mxu0 %v94
    %114 = vmatprep.subr.mxu0 0.0
    %115 = vmatpush1.msra.mxu0 %v95
    %116 = vmatprep.subr.mxu0 0.0
    %117 = vmatpush1.msra.mxu0 %v96
    %118 = vmatprep.subr.mxu0 0.0
    %119 = vmatpush1.msra.mxu0 %v97
    %120 = vmatprep.subr.mxu0 0.0
    %121 = vmatpush1.msra.mxu0 0.0
    %122 = vmatprep.subr.mxu0 0.0
    %123 = vmatpush1.msra.mxu0 0.0
    %124 = vmatprep.subr.mxu0 0.0
    %125 = vmatpush1.msra.mxu0 0.0
    %126 = vmatprep.subr.mxu0 0.0
    %127 = vmatpush1.msra.mxu0 0.0
    %128 = vmatprep.subr.mxu0 0.0
    %129 = vmatpush1.msra.mxu0 0.0
    %130 = vmatprep.subr.mxu0 0.0
    %131 = vmatpush1.msra.mxu0 0.0
    %132 = vmatprep.subr.mxu0 0.0
    %133 = vmatpush1.msra.mxu0 0.0
    %134 = vmatprep.subr.mxu0 0.0
    %135 = vmatpush1.msra.mxu0 0.0
    %136 = vmatprep.subr.mxu0 0.0
    %137 = vmatpush1.msra.mxu0 0.0
    %138 = vmatprep.subr.mxu0 0.0
    %139 = vmatpush1.msra.mxu0 0.0
    %140 = vmatprep.subr.mxu0 0.0
    %141 = vmatpush1.msra.mxu0 0.0
    %142 = vmatprep.subr.mxu0 0.0
    %143 = vmatpush1.msra.mxu0 0.0
    %144 = vmatprep.subr.mxu0 0.0
    %145 = vmatpush1.msra.mxu0 0.0
    %146 = vmatprep.subr.mxu0 0.0
    %147 = vmatpush1.msra.mxu0 0.0
    %148 = vmatprep.subr.mxu0 0.0
    %149 = vmatpush1.msra.mxu0 0.0
    %150 = vmatprep.subr.mxu0 0.0
    %151 = vmatpush1.msra.mxu0 0.0
    %152 = vmatprep.subr.mxu0 0.0
    %153 = vmatpush1.msra.mxu0 0.0
    %154 = vmatprep.subr.mxu0 0.0
    %155 = vmatpush1.msra.mxu0 0.0
    %156 = vmatprep.subr.mxu0 0.0
    %157 = vmatpush1.msra.mxu0 0.0
    %158 = vmatprep.subr.mxu0 0.0
    %159 = vmatpush1.msra.mxu0 0.0
    %160 = vmatprep.subr.mxu0 0.0
    %161 = vmatpush1.msra.mxu0 0.0
    %162 = vmatprep.subr.mxu0 0.0
    %163 = vmatpush1.msra.mxu0 0.0
    %164 = vmatprep.subr.mxu0 0.0
    %165 = vmatpush1.msra.mxu0 0.0
    %166 = vmatprep.subr.mxu0 0.0
    %167 = vmatpush1.msra.mxu0 0.0
    %168 = vmatprep.subr.mxu0 0.0
    %169 = vmatpush1.msra.mxu0 0.0
    %170 = vmatprep.subr.mxu0 0.0
    %171 = vmatpush1.msra.mxu0 0.0
    %172 = vmatprep.subr.mxu0 0.0
    %173 = vmatpush1.msra.mxu0 0.0
    %174 = vmatprep.subr.mxu0 0.0
    %175 = vmatpush1.msra.mxu0 0.0
    %176 = vmatprep.mubr.f32.mxu0 0.0
    %177 = vmatmul.mubr.f32.gmra.mrb[0].mxu0 %v107
    %v178 = vpop.f32.mrb[0].mxu0
    %v179 = vadd.f32 %v103, %v178
    %v180 = vpop.f32.mrb[0].mxu0
    %181 = vmatprep.mubr.f32.mxu0 0.0
    %182 = vmatmul.mubr.f32.gmra.mrb[0].mxu0 %v110
    %v183 = vpop.f32.mrb[0].mxu0
    %v184 = vadd.f32 %v103, %v183
    %v185 = vpop.f32.mrb[0].mxu0
    %186 = vdwg.mxu0
    %v187 = vmax.f32 %v179, 0.0
    %v188 = vmax.f32 %v184, 0.0
    %v189 = vmul.f32 %v187, %v187
    %v190 = vmul.f32 %v188, %v188
    %v191 = vld [vmem:[#allocation2] sm:$0xff]
    %v192 = vld [vmem:[#allocation2 + $0x8] sm:$0xff]
    %v193 = vld [vmem:[#allocation9] sm:$0xff]
    %v194 = vld [vmem:[#allocation9 + $0x8] sm:$0xff]
    %v195 = vld [vmem:[#allocation9 + $0x10] sm:$0xff]
    %v196 = vld [vmem:[#allocation9 + $0x18] sm:$0xff]
    %v197 = vld [vmem:[#allocation9 + $0x20] sm:$0xff]
    %v198 = vld [vmem:[#allocation9 + $0x28] sm:$0xff]
    %v199 = vld [vmem:[#allocation9 + $0x30] sm:$0xff]
    %v200 = vld [vmem:[#allocation9 + $0x38] sm:$0xff]
    %v201 = vld [vmem:[#allocation9 + $0x40] sm:$0xff]
    %v202 = vld [vmem:[#allocation9 + $0x48] sm:$0xff]
    %v203 = vld [vmem:[#allocation9 + $0x50] sm:$0xff]
    %v204 = vld [vmem:[#allocation9 + $0x58] sm:$0xff]
    %v205 = vld [vmem:[#allocation9 + $0x60] sm:$0xff]
    %v206 = vld [vmem:[#allocation9 + $0x68] sm:$0xff]
    %v207 = vld [vmem:[#allocation9 + $0x70] sm:$0xff]
    %v208 = vld [vmem:[#allocation9 + $0x78] sm:$0xff]
    %209 = vmatprep.subr.mxu0 0.0
    %210 = vmatpush1.msra.mxu0 %v193
    %211 = vmatprep.subr.mxu0 0.0
    %212 = vmatpush1.msra.mxu0 %v194
    %213 = vmatprep.subr.mxu0 0.0
    %214 = vmatpush1.msra.mxu0 %v195
    %215 = vmatprep.subr.mxu0 0.0
    %216 = vmatpush1.msra.mxu0 %v196
    %217 = vmatprep.subr.mxu0 0.0
    %218 = vmatpush1.msra.mxu0 %v197
    %219 = vmatprep.subr.mxu0 0.0
    %220 = vmatpush1.msra.mxu0 %v198
    %221 = vmatprep.subr.mxu0 0.0
    %222 = vmatpush1.msra.mxu0 %v199
    %223 = vmatprep.subr.mxu0 0.0
    %224 = vmatpush1.msra.mxu0 %v200
    %225 = vmatprep.subr.mxu0 0.0
    %226 = vmatpush1.msra.mxu0 %v201
    %227 = vmatprep.subr.mxu0 0.0
    %228 = vmatpush1.msra.mxu0 %v202
    %229 = vmatprep.subr.mxu0 0.0
    %230 = vmatpush1.msra.mxu0 %v203
    %231 = vmatprep.subr.mxu0 0.0
    %232 = vmatpush1.msra.mxu0 %v204
    %233 = vmatprep.subr.mxu0 0.0
    %234 = vmatpush1.msra.mxu0 %v205
    %235 = vmatprep.subr.mxu0 0.0
    %236 = vmatpush1.msra.mxu0 %v206
    %237 = vmatprep.subr.mxu0 0.0
    %238 = vmatpush1.msra.mxu0 %v207
    %239 = vmatprep.subr.mxu0 0.0
    %240 = vmatpush1.msra.mxu0 %v208
    %241 = vmatprep.subr.mxu0 0.0
    %242 = vmatpush1.msra.mxu0 0.0
    %243 = vmatprep.subr.mxu0 0.0
    %244 = vmatpush1.msra.mxu0 0.0
    %245 = vmatprep.subr.mxu0 0.0
    %246 = vmatpush1.msra.mxu0 0.0
    %247 = vmatprep.subr.mxu0 0.0
    %248 = vmatpush1.msra.mxu0 0.0
    %249 = vmatprep.subr.mxu0 0.0
    %250 = vmatpush1.msra.mxu0 0.0
    %251 = vmatprep.subr.mxu0 0.0
    %252 = vmatpush1.msra.mxu0 0.0
    %253 = vmatprep.subr.mxu0 0.0
    %254 = vmatpush1.msra.mxu0 0.0
    %255 = vmatprep.subr.mxu0 0.0
    %256 = vmatpush1.msra.mxu0 0.0
    %257 = vmatprep.subr.mxu0 0.0
    %258 = vmatpush1.msra.mxu0 0.0
    %259 = vmatprep.subr.mxu0 0.0
    %260 = vmatpush1.msra.mxu0 0.0
    %261 = vmatprep.subr.mxu0 0.0
    %262 = vmatpush1.msra.mxu0 0.0
    %263 = vmatprep.subr.mxu0 0.0
    %264 = vmatpush1.msra.mxu0 0.0
    %265 = vmatprep.subr.mxu0 0.0
    %266 = vmatpush1.msra.mxu0 0.0
    %267 = vmatprep.subr.mxu0 0.0
    %268 = vmatpush1.msra.mxu0 0.0
    %269 = vmatprep.subr.mxu0 0.0
    %270 = vmatpush1.msra.mxu0 0.0
    %271 = vmatprep.subr.mxu0 0.0
    %272 = vmatpush1.msra.mxu0 0.0
    %273 = vmatprep.mubr.f32.mxu0 0.0
    %274 = vmatmul.mubr.f32.gmra.mrb[0].mxu0 %v189
    %v275 = vpop.f32.mrb[0].mxu0
    %v276 = vadd.f32 0.0, %v275
    %v277 = vpop.f32.mrb[0].mxu0
    %278 = vmatprep.mubr.f32.mxu0 0.0
    %279 = vmatmul.mubr.f32.gmra.mrb[0].mxu0 %v190
    %v280 = vpop.f32.mrb[0].mxu0
    %v281 = vadd.f32 0.0, %v280
    %v282 = vpop.f32.mrb[0].mxu0
    %283 = vdwg.mxu0
    %v284 = vadd.f32 %v191, %v276
    %v285 = vadd.f32 %v192, %v281
    %286 = vst.msk [vmem:[#allocation2] sm:$0xff] %vm105, %v284
    %287 = vst.msk [vmem:[#allocation2 + $0x8] sm:$0xff] %vm105, %v285
    // Predicated region
    $region46: #{_persimmon_mlp_call.1} parent=1 // pred_check
      %p288 = pneg %p85
    $region47: #{_persimmon_mlp_call.1} parent=1 // pred_check_branch
      %290 = sbr.rel (%p288) target = $region49
    $region48: #{_persimmon_mlp_call.1} parent=1 // pred_region
      %v291 = vld [vmem:[#allocation2] sm:$0xff]
      %v292 = vld [vmem:[#allocation2 + $0x8] sm:$0xff]
      %v293 = vld [vmem:[#allocation11] sm:$0x1]
      %v295 = vlaneseq
      %v296 = vshrl.u32 %v295, 7
      %v297 = vsub.s32 0, %v296
      %v298 = vrot.slane %v293, %v297
      %v300 = vadd.f32 %v291, %v298
      %v301 = vadd.f32 %v292, %v298
      %302 = vst.msk [vmem:[#allocation12] sm:$0xff] %vm105, %v300
      %303 = vst.msk [vmem:[#allocation12 + $0x8] sm:$0xff] %vm105, %v301
    $region49: #{_persimmon_mlp_call.1} parent=1 // pred_fallthru
      _
    // Predicated region
    $region50: #{_persimmon_mlp_call.1} parent=1 // pred_check
      _
    $region51: #{_persimmon_mlp_call.1} parent=1 // pred_check_branch
      %305 = sbr.rel (0) target = $region53
    $region52: #{_persimmon_mlp_call.1} parent=1 // pred_region
      %s307 = ssub.s32 256, 256
      %308 = vsyncadd [#allocation5], %s307
      %s309 = sshll.u32 [#allocation12], 4
      %s310 = int_to_ptr.vmem [resolvable:$true] %s309
      %315 = dma.vmem_to_hbm [thread:$0]  %s310, 256, %s5, [#allocation5], 128, 128, 8
    $region53: #{_persimmon_mlp_call.1} parent=1 // pred_fallthru
      _
    // Predicated region
    $region54: #{_persimmon_mlp_call.1} parent=1 // pred_check
      _
    $region55: #{_persimmon_mlp_call.1} parent=1 // pred_check_branch
      %317 = sbr.rel (0) target = $region57
    $region56: #{_persimmon_mlp_call.1} parent=1 // pred_region
      %318 = dma.done [#allocation5], 256
    $region57: #{_persimmon_mlp_call.1} parent=1 // pred_fallthru
      _
    %319 = vsyncpa [#allocation4], 1
    %320 = vsyncpa [#allocation7], 1
    %321 = vsyncpa [#allocation10], 1
    %322 = vsyncpa [#allocation5], 1

</llo_original>
